<compile_context>
chip_gen: v5e
topology: v5e:2x2
jax: 0.10.0
libtpu: 0.0.40
codegen_flags: <defaults>
</compile_context>

<pallas_src>
import functools
import math

import jax
import jax.numpy as jnp
from jax.experimental import pallas as pl
from jax.experimental.pallas import tpu as pltpu


def _layernorm_kernel(x_ref, w_ref, b_ref, o_ref, *, eps, tail_dtype):
    # x_ref: (row_tile, hidden); w_ref/b_ref: (1, hidden) in `tail_dtype`.
    x = x_ref[...].astype(jnp.float32)
    inv_h = jnp.float32(1.0 / x.shape[-1])
    # Independent reductions (co-issue on the 2 XLU units on v6e/v7x).
    sum_x = jnp.sum(x, axis=-1, keepdims=True)
    sum_xx = jnp.sum(x * x, axis=-1, keepdims=True)
    mean = sum_x * inv_h
    # One-pass (biased) variance; clamp at 0 against catastrophic cancellation.
    var = jnp.maximum(sum_xx * inv_h - mean * mean, 0.0)
    inv_std = jax.lax.rsqrt(var + eps)  # eps inside the sqrt (TF-style); EUP rsqrt
    # Elementwise tail in `tail_dtype` (bf16 when output is bf16, else f32).
    y = (x - mean).astype(tail_dtype) * inv_std.astype(tail_dtype)
    o_ref[...] = (w_ref[...] * y + b_ref[...]).astype(o_ref.dtype)


def _round_up(x, m):
    return -(-x // m) * m


def _tpu_budgets():
    """Best-effort (vmem_limit_bytes, tile_budget_bytes, num_tensorcores)."""
    mib = 1024 * 1024
    physical_vmem = 64 * mib  # conservative default: v7x per-TC VMEM
    num_cores = 1             # conservative default: v5e/v6e (1 TC / chip)
    try:
        info = pltpu.get_tpu_info()
        physical_vmem = int(getattr(info, "vmem_capacity_bytes", physical_vmem))
        for attr in ("num_cores", "tensorcores_per_chip", "core_count"):
            v = getattr(info, attr, None)
            if v:
                num_cores = int(v)
                break
    except Exception:
        pass  # interpret mode / unknown chip: keep the conservative defaults
    # 128-MiB-VMEM parts (v5e/v6e) -> 64 MiB scoped limit; 64-MiB parts (v7x) -> 48 MiB.
    vmem_limit = min(64 * mib, (physical_vmem * 3) // 4)
    tile_budget = (vmem_limit * 3) // 4  # headroom for params / compiler scratch
    return vmem_limit, tile_budget, num_cores


def _pick_row_tile(rows, hidden, itemsize, tile_budget, num_cores):
    # Sublane packing: f32 -> 8 rows/vreg, bf16 -> 16, int8/fp8 -> 32.
    sublane = max(8, 32 // itemsize)
    # Per-row VMEM of one pipelined step: double-buffered in + out blocks plus
    # ~one persistent f32 copy of the tile (Mosaic fuses the elementwise chain).
    per_row = hidden * (4 * itemsize + 4)
    max_row_tile = 2048 if itemsize <= 2 else 1024
    tile = max(sublane, (tile_budget // per_row) // sublane * sublane)
    tile = min(tile, max_row_tile)
    tile = min(tile, _round_up(rows, sublane))
    # Only multi-TC chips benefit from forcing several grid steps; keep the
    # step count even so both TensorCores get equal work.
    if num_cores >= 2 and rows > sublane:
        steps = pl.cdiv(rows, tile)
        if steps % 2 == 1:
            tile = max(sublane, _round_up(pl.cdiv(rows, steps + 1), sublane))
    return tile


def bert_layer_norm(x, weight, bias, eps=1e-12, row_tile=None):
    """LayerNorm over the last axis of x, matching BertLayerNorm.forward."""
    orig_shape = x.shape
    hidden = orig_shape[-1]
    rows = int(math.prod(orig_shape[:-1])) if len(orig_shape) > 1 else 1

    x2 = x.reshape(rows, hidden)
    # Tail compute dtype: bf16 when the output is bf16 (bf16 VALU on v6e/v7x),
    # f32 otherwise.  Params are cast once in the wrapper, not per grid step.
    tail_dtype = jnp.bfloat16 if x.dtype == jnp.bfloat16 else jnp.float32
    w2 = weight.astype(tail_dtype).reshape(1, hidden)
    b2 = bias.astype(tail_dtype).reshape(1, hidden)

    vmem_limit, tile_budget, num_cores = _tpu_budgets()
    if row_tile is None:
        row_tile = _pick_row_tile(rows, hidden, x.dtype.itemsize,
                                  tile_budget, num_cores)

    # cdiv grid: a non-divisible last tile is masked by Pallas; never a single
    # whole-array fallback block.
    grid = (pl.cdiv(rows, row_tile),)

    out = pl.pallas_call(
        functools.partial(_layernorm_kernel, eps=eps, tail_dtype=tail_dtype),
        out_shape=jax.ShapeDtypeStruct((rows, hidden), x.dtype),
        grid=grid,
        in_specs=[
            pl.BlockSpec((row_tile, hidden), lambda i: (i, 0)),
            pl.BlockSpec((1, hidden), lambda i: (0, 0)),
            pl.BlockSpec((1, hidden), lambda i: (0, 0)),
        ],
        out_specs=pl.BlockSpec((row_tile, hidden), lambda i: (i, 0)),
        compiler_params=pltpu.CompilerParams(
            dimension_semantics=("parallel",),
            vmem_limit_bytes=vmem_limit,
        ),
    )(x2, w2, b2)

    return out.reshape(orig_shape)


if __name__ == "__main__":
    # Shapes implied by the module: x = (batch, seq, hidden), normalized over
    # the last axis; weight/bias = (hidden,).
    batch, seq, hidden = 2, 8, 32
    key = jax.random.PRNGKey(0)
    x = jax.random.normal(key, (batch, seq, hidden), dtype=jnp.float32)

    # Parameter init matching nn.Parameter(torch.ones/zeros).
    weight = jnp.ones((hidden,), dtype=jnp.float32)
    bias = jnp.zeros((hidden,), dtype=jnp.float32)

    out = bert_layer_norm(x, weight, bias, eps=1e-12)
    out = jax.block_until_ready(out)

    # Reference check in plain JAX (same math as the PyTorch module).
    u = jnp.mean(x, axis=-1, keepdims=True)
    s = jnp.mean((x - u) ** 2, axis=-1, keepdims=True)
    ref = weight * ((x - u) / jnp.sqrt(s + 1e-12)) + bias
    assert jnp.allclose(out, ref, atol=1e-4, rtol=1e-5), "mismatch vs reference"

    print("KERNEL_OK")
</pallas_src>

<mosaic_0001>
module attributes {stable_mosaic.version = 11 : i64} {
  func.func @_layernorm_kernel(%arg0: i32, %arg1: memref<16x32xf32, #tpu.memory_space<vmem>>, %arg2: memref<1x32xf32, #tpu.memory_space<vmem>>, %arg3: memref<1x32xf32, #tpu.memory_space<vmem>>, %arg4: memref<16x32xf32, #tpu.memory_space<vmem>>) attributes {dimension_semantics = [#tpu.dimension_semantics<parallel>], iteration_bounds = array<i64: 1>, scalar_prefetch = 0 : i64, scratch_operands = 0 : i64, tpu.core_type = #tpu.core_type<tc>, window_params = [{transform_indices = @transform_0, window_bounds = array<i64: 16, 32>}, {pipeline_mode = #tpu.pipeline_mode<synchronous>, transform_indices = @transform_1, window_bounds = array<i64: 1, 32>}, {pipeline_mode = #tpu.pipeline_mode<synchronous>, transform_indices = @transform_2, window_bounds = array<i64: 1, 32>}, {transform_indices = @transform_3, window_bounds = array<i64: 16, 32>}]} {
    %c0 = arith.constant 0 : index
    %c0_0 = arith.constant 0 : index
    %0 = vector.load %arg1[%c0, %c0_0] : memref<16x32xf32, #tpu.memory_space<vmem>>, vector<16x32xf32>
    %cst = arith.constant dense<0.000000e+00> : vector<16xf32>
    %1 = vector.multi_reduction <add>, %0, %cst [1] : vector<16x32xf32> to vector<16xf32>
    %2 = vector.shape_cast %1 : vector<16xf32> to vector<16x1xf32>
    %3 = arith.mulf %0, %0 : vector<16x32xf32>
    %cst_1 = arith.constant dense<0.000000e+00> : vector<16xf32>
    %4 = vector.multi_reduction <add>, %3, %cst_1 [1] : vector<16x32xf32> to vector<16xf32>
    %5 = vector.shape_cast %4 : vector<16xf32> to vector<16x1xf32>
    %cst_2 = arith.constant 3.125000e-02 : f32
    %6 = vector.broadcast %cst_2 : f32 to vector<16x1xf32>
    %7 = arith.mulf %2, %6 : vector<16x1xf32>
    %cst_3 = arith.constant 3.125000e-02 : f32
    %8 = vector.broadcast %cst_3 : f32 to vector<16x1xf32>
    %9 = arith.mulf %5, %8 : vector<16x1xf32>
    %10 = arith.mulf %7, %7 : vector<16x1xf32>
    %11 = arith.subf %9, %10 : vector<16x1xf32>
    %cst_4 = arith.constant 0.000000e+00 : f32
    %12 = vector.broadcast %cst_4 : f32 to vector<16x1xf32>
    %13 = arith.maximumf %11, %12 : vector<16x1xf32>
    %cst_5 = arith.constant 9.99999996E-13 : f32
    %14 = vector.broadcast %cst_5 : f32 to vector<16x1xf32>
    %15 = arith.addf %13, %14 : vector<16x1xf32>
    %16 = math.rsqrt %15 : vector<16x1xf32>
    %17 = vector.broadcast %7 : vector<16x1xf32> to vector<16x32xf32>
    %18 = arith.subf %0, %17 : vector<16x32xf32>
    %19 = vector.broadcast %16 : vector<16x1xf32> to vector<16x32xf32>
    %20 = arith.mulf %18, %19 : vector<16x32xf32>
    %c0_6 = arith.constant 0 : index
    %c0_7 = arith.constant 0 : index
    %21 = vector.load %arg2[%c0_6, %c0_7] : memref<1x32xf32, #tpu.memory_space<vmem>>, vector<1x32xf32>
    %22 = vector.broadcast %21 : vector<1x32xf32> to vector<16x32xf32>
    %23 = arith.mulf %22, %20 : vector<16x32xf32>
    %c0_8 = arith.constant 0 : index
    %c0_9 = arith.constant 0 : index
    %24 = vector.load %arg3[%c0_8, %c0_9] : memref<1x32xf32, #tpu.memory_space<vmem>>, vector<1x32xf32>
    %25 = vector.broadcast %24 : vector<1x32xf32> to vector<16x32xf32>
    %26 = arith.addf %23, %25 : vector<16x32xf32>
    %c0_10 = arith.constant 0 : index
    %c0_11 = arith.constant 0 : index
    %27 = vector.load %arg4[%c0_10, %c0_11] : memref<16x32xf32, #tpu.memory_space<vmem>>, vector<16x32xf32>
    tpu.vector_store %arg4[%c0_10, %c0_11], %26 {strides = array<i32>} : memref<16x32xf32, #tpu.memory_space<vmem>>, vector<16x32xf32>,
    return
  }
  func.func @transform_0(%arg0: i32) -> (i32, i32) {
    %c0_i32 = arith.constant 0 : i32
    %c0_i32_0 = arith.constant 0 : i32
    return %arg0, %c0_i32 : i32, i32
  }
  func.func @transform_1(%arg0: i32) -> (i32, i32) {
    %c0_i32 = arith.constant 0 : i32
    %c0_i32_0 = arith.constant 0 : i32
    %c0_i32_1 = arith.constant 0 : i32
    return %c0_i32, %c0_i32_0 : i32, i32
  }
  func.func @transform_2(%arg0: i32) -> (i32, i32) {
    %c0_i32 = arith.constant 0 : i32
    %c0_i32_0 = arith.constant 0 : i32
    %c0_i32_1 = arith.constant 0 : i32
    return %c0_i32, %c0_i32_0 : i32, i32
  }
  func.func @transform_3(%arg0: i32) -> (i32, i32) {
    %c0_i32 = arith.constant 0 : i32
    %c0_i32_0 = arith.constant 0 : i32
    return %arg0, %c0_i32 : i32, i32
  }
}

</mosaic_0001>

<llo_original>
// kernel: tpu_custom_call.1
$region0: #{tpu_custom_call.1}
  #allocation0 [shape = 'u32[]', space=smem, size = 0x4, offset = 0x4, fixed_abs, tag = 'smem constant byte address 0x4 - core index']
  #allocation1 [shape = 'u32[72,128]{1,0:T(1,128)}', space=vmem, size = 0x9000, scoped, tag = 'internal scratch']
  %s0 = inlined_call_operand.hbm [shape: f32[16,32], index: 0, kind: input, shape index: {}]
  %s1 = inlined_call_operand.hbm [shape: f32[1,32], index: 1, kind: input, shape index: {}]
  %s2 = inlined_call_operand.vmem [shape: f32[1,32], index: 2, kind: input, shape index: {}]
  %s3 = inlined_call_operand.hbm [shape: f32[16,32], index: 3, kind: output, shape index: {}]
  %s4 = sld [smem:[#allocation0]]
  $region30: #{tpu_custom_call.1} parent=0
    _
  %s6 = ssub.s32 1, %s4
  %s7 = scalar_select 0, %s6, %s4
  $region1: #{tpu_custom_call.1} parent=0
    #allocation2 [shape = 'u8[8192]{0}', space=vmem, size = 0x2000, scoped, tag = 'input window, operand 0, single buffered']
    #allocation3 [shape = 's32[1]{0}', space=sflag, size = 0x4, scoped, tag = 'scoped memory for tpu_custom_call.1']
    #allocation4 [shape = 's32[1]{0}', space=sflag, size = 0x4, scoped, tag = 'scoped memory for tpu_custom_call.1']
    #allocation5 [shape = 'u8[512]{0}', space=vmem, size = 0x400, scoped, tag = 'input window, operand 1, single buffered']
    #allocation6 [shape = 's32[1]{0}', space=sflag, size = 0x4, scoped, tag = 'scoped memory for tpu_custom_call.1']
    #allocation7 [shape = 'u8[8192]{0}', space=vmem, size = 0x2000, scoped, tag = 'output window, operand 0, single buffered']
    %8 = vsyncpa [#allocation3], 0
    %9 = vsyncpa [#allocation6], 0
    %10 = vsyncpa [#allocation4], 0
    // Predicated region
    $region2: #{tpu_custom_call.1} parent=1 // pred_check
      _
    $region3: #{tpu_custom_call.1} parent=1 // pred_check_branch
      %12 = sbr.rel (0) target = $region5
    $region4: #{tpu_custom_call.1} parent=1 // pred_region
      %14 = vsyncadd [#allocation3], 0
      %s15 = sshll.u32 %s0, 4
      %s16 = int_to_ptr.hbm [resolvable:$true] %s15
      %s17 = sshll.u32 [#allocation2], 4
      %s18 = int_to_ptr.vmem [resolvable:$true] %s17
      %23 = dma.hbm_to_vmem [thread:$0]  %s16, 256, %s18, [#allocation3], 128, 128, 8
    $region5: #{tpu_custom_call.1} parent=1 // pred_fallthru
      _
    // Predicated region
    $region6: #{tpu_custom_call.1} parent=1 // pred_check
      _
    $region7: #{tpu_custom_call.1} parent=1 // pred_check_branch
      %25 = sbr.rel (0) target = $region9
    $region8: #{tpu_custom_call.1} parent=1 // pred_region
      %27 = vsyncadd [#allocation6], 0
      %s29 = sshll.u32 %s1, 4
      %s30 = int_to_ptr.hbm [resolvable:$true] %s29
      %s31 = sshll.u32 [#allocation5], 4
      %s32 = int_to_ptr.vmem [resolvable:$true] %s31
      %34 = dma.hbm_to_vmem [thread:$0]  %s30, 16, %s32, [#allocation6]
    $region9: #{tpu_custom_call.1} parent=1 // pred_fallthru
      _
    // Predicated region
    $region10: #{tpu_custom_call.1} parent=1 // pred_check
      _
    $region11: #{tpu_custom_call.1} parent=1 // pred_check_branch
      %36 = sbr.rel (0) target = $region13
    $region12: #{tpu_custom_call.1} parent=1 // pred_region
      _
    $region13: #{tpu_custom_call.1} parent=1 // pred_fallthru
      _
    // Predicated region
    $region14: #{tpu_custom_call.1} parent=1 // pred_check
      _
    $region15: #{tpu_custom_call.1} parent=1 // pred_check_branch
      %38 = sbr.rel (0) target = $region17
    $region16: #{tpu_custom_call.1} parent=1 // pred_region
      %40 = dma.done [#allocation3], 256
    $region17: #{tpu_custom_call.1} parent=1 // pred_fallthru
      _
    // Predicated region
    $region18: #{tpu_custom_call.1} parent=1 // pred_check
      _
    $region19: #{tpu_custom_call.1} parent=1 // pred_check_branch
      %42 = sbr.rel (0) target = $region21
    $region20: #{tpu_custom_call.1} parent=1 // pred_region
      %44 = dma.done [#allocation6], 16
    $region21: #{tpu_custom_call.1} parent=1 // pred_fallthru
      _
    %v45 = vld [vmem:[#allocation2] sm:$0xff]
    %v46 = vld [vmem:[#allocation2 + $0x8] sm:$0xff]
    %vm47 = vcmask 261120
    %v48 = vsel %vm47, %v45, 0.0
    %49 = vadd.xlane.f32.xlu0 %v48
    %v50 = vpop.xlane.xlu0 %49
    %v51 = vsel %vm47, %v46, 0.0
    %52 = vadd.xlane.f32.xlu0 %v51
    %v53 = vpop.xlane.xlu0 %52
    %v54 = vmul.f32 %v45, %v45
    %v55 = vmul.f32 %v46, %v46
    %v56 = vsel %vm47, %v54, 0.0
    %57 = vadd.xlane.f32.xlu0 %v56
    %v58 = vpop.xlane.xlu0 %57
    %v59 = vsel %vm47, %v55, 0.0
    %60 = vadd.xlane.f32.xlu0 %v59
    %v61 = vpop.xlane.xlu0 %60
    %v62 = vmul.f32 %v50, 0.03125
    %v63 = vmul.f32 %v53, 0.03125
    %v64 = vmul.f32 %v58, 0.03125
    %v65 = vmul.f32 %v61, 0.03125
    %v66 = vmul.f32 %v62, %v62
    %v67 = vmul.f32 %v63, %v63
    %v68 = vsub.f32 %v64, %v66
    %v69 = vsub.f32 %v65, %v67
    %v70 = vmax.f32 %v68, 0.0
    %v71 = vmax.f32 %v69, 0.0
    %v72 = vadd.f32 %v70, 1e-12
    %v73 = vadd.f32 %v71, 1e-12
    %v74 = vrsqrt.pop %v72
    %v75 = vmul.f32 %v74, %v72
    %v76 = vmul.f32 %v75, %v74
    %v77 = vmul.f32 0.5, %v76
    %v78 = vsub.f32 1.5, %v77
    %v79 = vmul.f32 %v74, %v78
    %vm80 = vweird.f32 %v72
    %vm81 = vweird.f32 %v74
    %vm82 = vmor %vm80, %vm81
    %v83 = vsel %vm82, %v74, %v79
    %v84 = vrsqrt.pop %v73
    %v85 = vmul.f32 %v84, %v73
    %v86 = vmul.f32 %v85, %v84
    %v87 = vmul.f32 0.5, %v86
    %v88 = vsub.f32 1.5, %v87
    %v89 = vmul.f32 %v84, %v88
    %vm90 = vweird.f32 %v73
    %vm91 = vweird.f32 %v84
    %vm92 = vmor %vm90, %vm91
    %v93 = vsel %vm92, %v84, %v89
    %v94 = vsub.f32 %v45, %v62
    %v95 = vsub.f32 %v46, %v63
    %v96 = vmul.f32 %v94, %v83
    %v97 = vmul.f32 %v95, %v93
    %v98 = vld [vmem:[#allocation5] sm:$0x1]
    %v100 = vperm.slane %v98, 0
    %v102 = vmul.f32 %v100, %v96
    %v103 = vmul.f32 %v100, %v97
    %v104 = vld [vmem:[%s2] sm:$0x1]
    %v106 = vperm.slane %v104, 0
    %v108 = vadd.f32 %v102, %v106
    %v109 = vadd.f32 %v103, %v106
    %110 = vst.msk [vmem:[#allocation7] sm:$0xff] %vm47, %v108
    %111 = vst.msk [vmem:[#allocation7 + $0x8] sm:$0xff] %vm47, %v109
    // Predicated region
    $region22: #{tpu_custom_call.1} parent=1 // pred_check
      _
    $region23: #{tpu_custom_call.1} parent=1 // pred_check_branch
      %113 = sbr.rel (0) target = $region25
    $region24: #{tpu_custom_call.1} parent=1 // pred_region
      %115 = vsyncadd [#allocation4], 0
      %s116 = sshll.u32 [#allocation7], 4
      %s117 = int_to_ptr.vmem [resolvable:$true] %s116
      %s118 = sshll.u32 %s3, 4
      %s119 = int_to_ptr.hbm [resolvable:$true] %s118
      %124 = dma.vmem_to_hbm [thread:$0]  %s117, 256, %s119, [#allocation4], 128, 128, 8
    $region25: #{tpu_custom_call.1} parent=1 // pred_fallthru
      _
    // Predicated region
    $region26: #{tpu_custom_call.1} parent=1 // pred_check
      _
    $region27: #{tpu_custom_call.1} parent=1 // pred_check_branch
      %126 = sbr.rel (0) target = $region29
    $region28: #{tpu_custom_call.1} parent=1 // pred_region
      %128 = dma.done [#allocation4], 256
    $region29: #{tpu_custom_call.1} parent=1 // pred_fallthru
      _
    %129 = vsyncpa [#allocation3], 1
    %130 = vsyncpa [#allocation6], 1
    %131 = vsyncpa [#allocation4], 1

</llo_original>
